<compile_context>
chip_gen: v7x
topology: tpu7x:2x2x1
jax: 0.10.0
libtpu: 0.0.40
codegen_flags: <defaults>
</compile_context>

<pallas_src>
import jax
import jax.numpy as jnp
from jax.experimental import pallas as pl
from jax.experimental.pallas import tpu as pltpu

_SMOOTH = 1e-5
_LANES = 128
_SUBLANES = 8
# Double-buffered input blocks are budgeted well under the smallest scoped-VMEM
# default we might meet (v5e: 16 MiB), leaving room for in-kernel temporaries.
_BLOCK_BUDGET_BYTES = 8 << 20
# 32 MiB scoped VMEM: safe on v5e/v6e (128 MiB physical) and leaves headroom on
# v7x (64 MiB physical, 32 MiB scoped default).
_VMEM_LIMIT_BYTES = 32 << 20
_MAX_TC = 4096  # cap on 128-lane columns per block


def _round_up(x, m):
    return -(-x // m) * m


def _fold(v):
    """(B, Tc, 128) -> (B, 8, 128) partial sums using only vreg-wise VPU adds.

    Requires Tc % 8 == 0 (guaranteed by the wrapper's padding / tile choice).
    """
    b, tc, lanes = v.shape
    return v.reshape(b, tc // _SUBLANES, _SUBLANES, lanes).sum(axis=1)


def _dice_kernel(x_ref, t_ref, inter_ref, zsum_ref, ysum_ref):
    """Accumulates lane-dense partials of intersect / z_sum / y_sum.

    x_ref:     (B, C, Tc, 128) float  VMEM block
    t_ref:     (B, Tc, 128)    int    VMEM block (original target dtype)
    inter_ref, zsum_ref, ysum_ref: (1, B, 8, 128) f32 VMEM output blocks,
        resident across the inner (reduction) grid axis.
    """
    i = pl.program_id(1)

    @pl.when(i == 0)
    def _init():
        inter_ref[...] = jnp.zeros_like(inter_ref)
        zsum_ref[...] = jnp.zeros_like(zsum_ref)
        ysum_ref[...] = jnp.zeros_like(ysum_ref)

    x = x_ref[...].astype(jnp.float32)                # (B, C, Tc, 128)
    score = jnp.sum(x, axis=1)                        # channel sum: VPU vreg adds
    tgt = (t_ref[...] > 0).astype(jnp.float32)        # (B, Tc, 128)

    inter_ref[0] += _fold(score * tgt)                # intersect partials
    zsum_ref[0] += _fold(score * score)               # z_sum partials
    ysum_ref[0] += _fold(tgt)                         # y_sum partials (tgt is 0/1)


def _count_kernel(t_ref, cnt_ref):
    """Accumulates lane-dense partials of sum(target > 0) (softmax fast path)."""
    i = pl.program_id(1)

    @pl.when(i == 0)
    def _init():
        cnt_ref[...] = jnp.zeros_like(cnt_ref)

    tgt = (t_ref[...] > 0).astype(jnp.float32)
    cnt_ref[0] += _fold(tgt)


def _plan(spatial, per_col_bytes):
    """Choose (Tc, G_outer, G_inner, padded_R) for a lane-dense (R, 128) layout.

    per_col_bytes = HBM bytes moved per 128-lane column of one (double
    buffered) grid step.  Tc is a multiple of 8 so blocks satisfy the (8, 128)
    tiling rule and the in-kernel fold is relayout-free.
    """
    r0 = _round_up(_round_up(spatial, _LANES) // _LANES, _SUBLANES)
    tc_max = (_BLOCK_BUDGET_BYTES // max(per_col_bytes, 1)) // _SUBLANES * _SUBLANES
    tc_max = max(_SUBLANES, min(_MAX_TC, tc_max))
    if r0 <= tc_max:
        return r0, 1, 1, r0
    tc = tc_max
    n_blocks = -(-r0 // tc)
    g_outer = 2 if n_blocks >= 2 else 1      # v7x: shard outer axis across both TCs
    g_inner = -(-n_blocks // g_outer)
    return tc, g_outer, g_inner, g_outer * g_inner * tc


def _compiler_params():
    return pltpu.CompilerParams(
        dimension_semantics=("parallel", "arbitrary"),
        vmem_limit_bytes=_VMEM_LIMIT_BYTES,
    )


def _dice_sums(x, t):
    """x: (B, C, S) float, t: (B, S) any numeric -> (intersect, z_sum, y_sum)."""
    B, C, S = x.shape
    per_col = 2 * _LANES * (B * C * x.dtype.itemsize + B * t.dtype.itemsize)
    tc, go, gi, r = _plan(S, per_col)
    sp = r * _LANES
    if sp != S:  # zero padding contributes nothing to any of the three sums
        x = jnp.pad(x, ((0, 0), (0, 0), (0, sp - S)))
        t = jnp.pad(t, ((0, 0), (0, sp - S)))
    x = x.reshape(B, C, r, _LANES)
    t = t.reshape(B, r, _LANES)

    part_shape = jax.ShapeDtypeStruct((go, B, _SUBLANES, _LANES), jnp.float32)
    part_spec = pl.BlockSpec((1, B, _SUBLANES, _LANES), lambda o, i: (o, 0, 0, 0))

    out_i, out_z, out_y = pl.pallas_call(
        _dice_kernel,
        out_shape=(part_shape, part_shape, part_shape),
        grid_spec=pltpu.PrefetchScalarGridSpec(
            num_scalar_prefetch=0,
            grid=(go, gi),
            in_specs=[
                pl.BlockSpec((B, C, tc, _LANES), lambda o, i: (0, 0, o * gi + i, 0)),
                pl.BlockSpec((B, tc, _LANES), lambda o, i: (0, o * gi + i, 0)),
            ],
            out_specs=(part_spec, part_spec, part_spec),
        ),
        compiler_params=_compiler_params(),
    )(x, t)
    return jnp.sum(out_i), jnp.sum(out_z), jnp.sum(out_y)


def _count_positive(t):
    """t: (B, S) -> float32 count of (t > 0), via a target-only kernel."""
    B, S = t.shape
    per_col = 2 * _LANES * B * t.dtype.itemsize
    tc, go, gi, r = _plan(S, per_col)
    sp = r * _LANES
    if sp != S:
        t = jnp.pad(t, ((0, 0), (0, sp - S)))
    t = t.reshape(B, r, _LANES)

    out = pl.pallas_call(
        _count_kernel,
        out_shape=jax.ShapeDtypeStruct((go, B, _SUBLANES, _LANES), jnp.float32),
        grid_spec=pltpu.PrefetchScalarGridSpec(
            num_scalar_prefetch=0,
            grid=(go, gi),
            in_specs=[pl.BlockSpec((B, tc, _LANES), lambda o, i: (0, o * gi + i, 0))],
            out_specs=pl.BlockSpec((1, B, _SUBLANES, _LANES),
                                   lambda o, i: (o, 0, 0, 0)),
        ),
        compiler_params=_compiler_params(),
    )(t)
    return jnp.sum(out)


def dice_loss_sam(inputs, target, weight=None, softmax=False):
    """inputs: (B, C, H, W) float, target: (B, H, W) numeric. Returns scalar f32.

    `weight` is accepted for signature parity with the PyTorch module but is
    unused there as well (the combined-channel dice ignores it).
    """
    del weight
    B, C, H, W = inputs.shape
    assert target.shape == (B, H, W), (inputs.shape, target.shape)
    S = H * W
    smooth = jnp.float32(_SMOOTH)

    if softmax:
        # softmax over channels sums to exactly 1 per pixel, so
        # score == 1 everywhere: intersect = y_sum = sum(target > 0),
        # z_sum = B*H*W.  The (B, C, H, W) input never needs to be read.
        cnt = _count_positive(target.reshape(B, S))
        intersect = cnt
        y_sum = cnt
        z_sum = jnp.float32(B * S)
    else:
        intersect, z_sum, y_sum = _dice_sums(
            inputs.reshape(B, C, S), target.reshape(B, S))

    return jnp.float32(1.0) - (
        (jnp.float32(2.0) * intersect + smooth) / (z_sum + y_sum + smooth))


if __name__ == "__main__":
    key = jax.random.PRNGKey(0)
    k1, k2 = jax.random.split(key)

    B, C, H, W = 2, 4, 16, 16  # n_classes = C = 4 (unused in forward)
    inputs = jax.random.uniform(k1, (B, C, H, W), dtype=jnp.float32)
    target = jax.random.randint(k2, (B, H, W), 0, C)  # int32, passed through as-is

    # --- softmax=False path ---
    loss = jax.block_until_ready(dice_loss_sam(inputs, target, softmax=False))

    smooth = 1e-5
    score_ref = jnp.sum(inputs, axis=1)
    tgt_ref = (target > 0).astype(jnp.float32)
    inter = jnp.sum(score_ref * tgt_ref)
    y_sum = jnp.sum(tgt_ref * tgt_ref)
    z_sum = jnp.sum(score_ref * score_ref)
    ref = 1.0 - (2.0 * inter + smooth) / (z_sum + y_sum + smooth)
    assert abs(float(loss) - float(ref)) < 1e-5, (float(loss), float(ref))

    # --- softmax=True path (algebraic shortcut: channel-sum of softmax == 1) ---
    loss_sm = jax.block_until_ready(dice_loss_sam(inputs, target, softmax=True))
    score_sm = jnp.sum(jax.nn.softmax(inputs, axis=1), axis=1)
    inter_sm = jnp.sum(score_sm * tgt_ref)
    z_sum_sm = jnp.sum(score_sm * score_sm)
    ref_sm = 1.0 - (2.0 * inter_sm + smooth) / (z_sum_sm + y_sum + smooth)
    assert abs(float(loss_sm) - float(ref_sm)) < 1e-4, (float(loss_sm), float(ref_sm))

    print("KERNEL_OK")
</pallas_src>

<mosaic_0001>
module attributes {stable_mosaic.version = 11 : i64} {
  func.func @_dice_kernel(%arg0: i32, %arg1: i32, %arg2: memref<2x4x8x128xf32, #tpu.memory_space<vmem>>, %arg3: memref<2x8x128xi32, #tpu.memory_space<vmem>>, %arg4: memref<1x2x8x128xf32, #tpu.memory_space<vmem>>, %arg5: memref<1x2x8x128xf32, #tpu.memory_space<vmem>>, %arg6: memref<1x2x8x128xf32, #tpu.memory_space<vmem>>) attributes {dimension_semantics = [#tpu.dimension_semantics<parallel>, #tpu.dimension_semantics<arbitrary>], iteration_bounds = array<i64: 1, 1>, scalar_prefetch = 0 : i64, scratch_operands = 0 : i64, tpu.core_type = #tpu.core_type<tc>, window_params = [{transform_indices = @transform_0, window_bounds = array<i64: 2, 4, 8, 128>}, {transform_indices = @transform_1, window_bounds = array<i64: 2, 8, 128>}, {transform_indices = @transform_2, window_bounds = array<i64: 1, 2, 8, 128>}, {transform_indices = @transform_3, window_bounds = array<i64: 1, 2, 8, 128>}, {transform_indices = @transform_4, window_bounds = array<i64: 1, 2, 8, 128>}]} {
    %c0_i32 = arith.constant 0 : i32
    %0 = arith.cmpi eq, %arg1, %c0_i32 : i32
    %1 = arith.extui %0 : i1 to i32
    %c0_i32_0 = arith.constant 0 : i32
    %2 = arith.cmpi ne, %1, %c0_i32_0 : i32
    scf.if %2 {
      %cst_35 = arith.constant 0.000000e+00 : f32
      %36 = vector.broadcast %cst_35 : f32 to vector<1x2x8x128xf32>
      %c0_36 = arith.constant 0 : index
      %c0_37 = arith.constant 0 : index
      %c0_38 = arith.constant 0 : index
      %c0_39 = arith.constant 0 : index
      %37 = vector.load %arg4[%c0_36, %c0_37, %c0_38, %c0_39] : memref<1x2x8x128xf32, #tpu.memory_space<vmem>>, vector<1x2x8x128xf32>
      tpu.vector_store %arg4[%c0_36, %c0_37, %c0_38, %c0_39], %36 {strides = array<i32>} : memref<1x2x8x128xf32, #tpu.memory_space<vmem>>, vector<1x2x8x128xf32>,
      %cst_40 = arith.constant 0.000000e+00 : f32
      %38 = vector.broadcast %cst_40 : f32 to vector<1x2x8x128xf32>
      %c0_41 = arith.constant 0 : index
      %c0_42 = arith.constant 0 : index
      %c0_43 = arith.constant 0 : index
      %c0_44 = arith.constant 0 : index
      %39 = vector.load %arg5[%c0_41, %c0_42, %c0_43, %c0_44] : memref<1x2x8x128xf32, #tpu.memory_space<vmem>>, vector<1x2x8x128xf32>
      tpu.vector_store %arg5[%c0_41, %c0_42, %c0_43, %c0_44], %38 {strides = array<i32>} : memref<1x2x8x128xf32, #tpu.memory_space<vmem>>, vector<1x2x8x128xf32>,
      %cst_45 = arith.constant 0.000000e+00 : f32
      %40 = vector.broadcast %cst_45 : f32 to vector<1x2x8x128xf32>
      %c0_46 = arith.constant 0 : index
      %c0_47 = arith.constant 0 : index
      %c0_48 = arith.constant 0 : index
      %c0_49 = arith.constant 0 : index
      %41 = vector.load %arg6[%c0_46, %c0_47, %c0_48, %c0_49] : memref<1x2x8x128xf32, #tpu.memory_space<vmem>>, vector<1x2x8x128xf32>
      tpu.vector_store %arg6[%c0_46, %c0_47, %c0_48, %c0_49], %40 {strides = array<i32>} : memref<1x2x8x128xf32, #tpu.memory_space<vmem>>, vector<1x2x8x128xf32>,
    } else {
    }
    %c0 = arith.constant 0 : index
    %c0_1 = arith.constant 0 : index
    %c0_2 = arith.constant 0 : index
    %c0_3 = arith.constant 0 : index
    %3 = vector.load %arg2[%c0, %c0_1, %c0_2, %c0_3] : memref<2x4x8x128xf32, #tpu.memory_space<vmem>>, vector<2x4x8x128xf32>
    %cst = arith.constant dense<0.000000e+00> : vector<2x8x128xf32>
    %4 = vector.multi_reduction <add>, %3, %cst [1] : vector<2x4x8x128xf32> to vector<2x8x128xf32>
    %c0_4 = arith.constant 0 : index
    %c0_5 = arith.constant 0 : index
    %c0_6 = arith.constant 0 : index
    %5 = vector.load %arg3[%c0_4, %c0_5, %c0_6] : memref<2x8x128xi32, #tpu.memory_space<vmem>>, vector<2x8x128xi32>
    %c0_i32_7 = arith.constant 0 : i32
    %6 = vector.broadcast %c0_i32_7 : i32 to vector<2x8x128xi32>
    %7 = arith.cmpi sgt, %5, %6 : vector<2x8x128xi32>
    %8 = arith.extui %7 : vector<2x8x128xi1> to vector<2x8x128xi32>
    %9 = arith.sitofp %8 : vector<2x8x128xi32> to vector<2x8x128xf32>
    %c0_8 = arith.constant 0 : index
    %c0_9 = arith.constant 0 : index
    %c0_10 = arith.constant 0 : index
    %c0_11 = arith.constant 0 : index
    %10 = vector.load %arg4[%c0_8, %c0_9, %c0_10, %c0_11] : memref<1x2x8x128xf32, #tpu.memory_space<vmem>>, vector<1x2x8x128xf32>
    %11 = vector.shape_cast %10 : vector<1x2x8x128xf32> to vector<2x8x128xf32>
    %12 = arith.mulf %4, %9 : vector<2x8x128xf32>
    %13 = vector.shape_cast %12 : vector<2x8x128xf32> to vector<2x1x8x128xf32>
    %cst_12 = arith.constant dense<0.000000e+00> : vector<2x8x128xf32>
    %14 = vector.multi_reduction <add>, %13, %cst_12 [1] : vector<2x1x8x128xf32> to vector<2x8x128xf32>
    %15 = arith.addf %11, %14 : vector<2x8x128xf32>
    %c0_13 = arith.constant 0 : index
    %c0_14 = arith.constant 0 : index
    %c0_15 = arith.constant 0 : index
    %c0_16 = arith.constant 0 : index
    %16 = vector.load %arg4[%c0_13, %c0_14, %c0_15, %c0_16] : memref<1x2x8x128xf32, #tpu.memory_space<vmem>>, vector<1x2x8x128xf32>
    %17 = vector.shape_cast %16 : vector<1x2x8x128xf32> to vector<2x8x128xf32>
    %18 = vector.shape_cast %15 : vector<2x8x128xf32> to vector<1x2x8x128xf32>
    tpu.vector_store %arg4[%c0_13, %c0_14, %c0_15, %c0_16], %18 {strides = array<i32>} : memref<1x2x8x128xf32, #tpu.memory_space<vmem>>, vector<1x2x8x128xf32>,
    %c0_17 = arith.constant 0 : index
    %c0_18 = arith.constant 0 : index
    %c0_19 = arith.constant 0 : index
    %c0_20 = arith.constant 0 : index
    %19 = vector.load %arg5[%c0_17, %c0_18, %c0_19, %c0_20] : memref<1x2x8x128xf32, #tpu.memory_space<vmem>>, vector<1x2x8x128xf32>
    %20 = vector.shape_cast %19 : vector<1x2x8x128xf32> to vector<2x8x128xf32>
    %21 = arith.mulf %4, %4 : vector<2x8x128xf32>
    %22 = vector.shape_cast %21 : vector<2x8x128xf32> to vector<2x1x8x128xf32>
    %cst_21 = arith.constant dense<0.000000e+00> : vector<2x8x128xf32>
    %23 = vector.multi_reduction <add>, %22, %cst_21 [1] : vector<2x1x8x128xf32> to vector<2x8x128xf32>
    %24 = arith.addf %20, %23 : vector<2x8x128xf32>
    %c0_22 = arith.constant 0 : index
    %c0_23 = arith.constant 0 : index
    %c0_24 = arith.constant 0 : index
    %c0_25 = arith.constant 0 : index
    %25 = vector.load %arg5[%c0_22, %c0_23, %c0_24, %c0_25] : memref<1x2x8x128xf32, #tpu.memory_space<vmem>>, vector<1x2x8x128xf32>
    %26 = vector.shape_cast %25 : vector<1x2x8x128xf32> to vector<2x8x128xf32>
    %27 = vector.shape_cast %24 : vector<2x8x128xf32> to vector<1x2x8x128xf32>
    tpu.vector_store %arg5[%c0_22, %c0_23, %c0_24, %c0_25], %27 {strides = array<i32>} : memref<1x2x8x128xf32, #tpu.memory_space<vmem>>, vector<1x2x8x128xf32>,
    %c0_26 = arith.constant 0 : index
    %c0_27 = arith.constant 0 : index
    %c0_28 = arith.constant 0 : index
    %c0_29 = arith.constant 0 : index
    %28 = vector.load %arg6[%c0_26, %c0_27, %c0_28, %c0_29] : memref<1x2x8x128xf32, #tpu.memory_space<vmem>>, vector<1x2x8x128xf32>
    %29 = vector.shape_cast %28 : vector<1x2x8x128xf32> to vector<2x8x128xf32>
    %30 = vector.shape_cast %9 : vector<2x8x128xf32> to vector<2x1x8x128xf32>
    %cst_30 = arith.constant dense<0.000000e+00> : vector<2x8x128xf32>
    %31 = vector.multi_reduction <add>, %30, %cst_30 [1] : vector<2x1x8x128xf32> to vector<2x8x128xf32>
    %32 = arith.addf %29, %31 : vector<2x8x128xf32>
    %c0_31 = arith.constant 0 : index
    %c0_32 = arith.constant 0 : index
    %c0_33 = arith.constant 0 : index
    %c0_34 = arith.constant 0 : index
    %33 = vector.load %arg6[%c0_31, %c0_32, %c0_33, %c0_34] : memref<1x2x8x128xf32, #tpu.memory_space<vmem>>, vector<1x2x8x128xf32>
    %34 = vector.shape_cast %33 : vector<1x2x8x128xf32> to vector<2x8x128xf32>
    %35 = vector.shape_cast %32 : vector<2x8x128xf32> to vector<1x2x8x128xf32>
    tpu.vector_store %arg6[%c0_31, %c0_32, %c0_33, %c0_34], %35 {strides = array<i32>} : memref<1x2x8x128xf32, #tpu.memory_space<vmem>>, vector<1x2x8x128xf32>,
    return
  }
  func.func @transform_0(%arg0: i32, %arg1: i32) -> (i32, i32, i32, i32) {
    %c1_i32 = arith.constant 1 : i32
    %0 = arith.muli %arg0, %c1_i32 : i32
    %1 = arith.addi %0, %arg1 : i32
    %c0_i32 = arith.constant 0 : i32
    %c0_i32_0 = arith.constant 0 : i32
    %c0_i32_1 = arith.constant 0 : i32
    %c0_i32_2 = arith.constant 0 : i32
    return %c0_i32, %c0_i32_0, %1, %c0_i32_1 : i32, i32, i32, i32
  }
  func.func @transform_1(%arg0: i32, %arg1: i32) -> (i32, i32, i32) {
    %c1_i32 = arith.constant 1 : i32
    %0 = arith.muli %arg0, %c1_i32 : i32
    %1 = arith.addi %0, %arg1 : i32
    %c0_i32 = arith.constant 0 : i32
    %c0_i32_0 = arith.constant 0 : i32
    %c0_i32_1 = arith.constant 0 : i32
    return %c0_i32, %1, %c0_i32_0 : i32, i32, i32
  }
  func.func @transform_2(%arg0: i32, %arg1: i32) -> (i32, i32, i32, i32) {
    %c0_i32 = arith.constant 0 : i32
    %c0_i32_0 = arith.constant 0 : i32
    %c0_i32_1 = arith.constant 0 : i32
    %c0_i32_2 = arith.constant 0 : i32
    return %arg0, %c0_i32, %c0_i32_0, %c0_i32_1 : i32, i32, i32, i32
  }
  func.func @transform_3(%arg0: i32, %arg1: i32) -> (i32, i32, i32, i32) {
    %c0_i32 = arith.constant 0 : i32
    %c0_i32_0 = arith.constant 0 : i32
    %c0_i32_1 = arith.constant 0 : i32
    %c0_i32_2 = arith.constant 0 : i32
    return %arg0, %c0_i32, %c0_i32_0, %c0_i32_1 : i32, i32, i32, i32
  }
  func.func @transform_4(%arg0: i32, %arg1: i32) -> (i32, i32, i32, i32) {
    %c0_i32 = arith.constant 0 : i32
    %c0_i32_0 = arith.constant 0 : i32
    %c0_i32_1 = arith.constant 0 : i32
    %c0_i32_2 = arith.constant 0 : i32
    return %arg0, %c0_i32, %c0_i32_0, %c0_i32_1 : i32, i32, i32, i32
  }
}

</mosaic_0001>

<llo_original>
// kernel: tpu_custom_call.1
$region0: #{tpu_custom_call.1}
  #allocation0 [shape = 'u32[]', space=smem, size = 0x4, offset = 0x4, fixed_abs, tag = 'smem constant byte address 0x4 - core index']
  #allocation1 [shape = 'u32[144,128]{1,0:T(1,128)}', space=vmem, size = 0x12000, scoped, tag = 'internal scratch']
  %s0 = inlined_call_operand.hbm [shape: f32[2,4,8,128], index: 0, kind: input, shape index: {}]
  %s1 = inlined_call_operand.hbm [shape: s32[2,8,128], index: 1, kind: input, shape index: {}]
  %s2 = inlined_call_operand.hbm [shape: f32[1,2,8,128], index: 2, kind: output, shape index: {0}]
  %s3 = inlined_call_operand.hbm [shape: f32[1,2,8,128], index: 3, kind: output, shape index: {1}]
  %s4 = inlined_call_operand.hbm [shape: f32[1,2,8,128], index: 4, kind: output, shape index: {2}]
  %5 = xla_tuple %s2, %s3, %s4
  %s6 = sld [smem:[#allocation0]]
  $region46: #{tpu_custom_call.1} parent=0
    _
  %s8 = ssub.s32 1, %s6
  %s9 = scalar_select 0, %s8, %s6
  $region1: #{tpu_custom_call.1} parent=0
    #allocation2 [shape = 'u8[32768]{0}', space=vmem, size = 0x8000, scoped, tag = 'input window, operand 0, single buffered']
    #allocation3 [shape = 's32[1]{0}', space=sflag, size = 0x4, scoped, tag = 'scoped memory for tpu_custom_call.1']
    #allocation4 [shape = 's32[1]{0}', space=sflag, size = 0x4, scoped, tag = 'scoped memory for tpu_custom_call.1']
    #allocation5 [shape = 'u8[8192]{0}', space=vmem, size = 0x2000, scoped, tag = 'input window, operand 1, single buffered']
    #allocation6 [shape = 's32[1]{0}', space=sflag, size = 0x4, scoped, tag = 'scoped memory for tpu_custom_call.1']
    #allocation7 [shape = 'u8[8192]{0}', space=vmem, size = 0x2000, scoped, tag = 'output window, operand 0, single buffered']
    #allocation8 [shape = 'u8[8192]{0}', space=vmem, size = 0x2000, scoped, tag = 'output window, operand 1, single buffered']
    #allocation9 [shape = 's32[1]{0}', space=sflag, size = 0x4, scoped, tag = 'scoped memory for tpu_custom_call.1']
    #allocation10 [shape = 'u8[8192]{0}', space=vmem, size = 0x2000, scoped, tag = 'output window, operand 2, single buffered']
    %10 = vsyncpa [#allocation3], 0
    %11 = vsyncpa [#allocation6], 0
    %12 = vsyncpa [#allocation4], 0
    %13 = vsyncpa [#allocation9], 0
    // Predicated region
    $region2: #{tpu_custom_call.1} parent=1 // pred_check
      _
    $region3: #{tpu_custom_call.1} parent=1 // pred_check_branch
      %15 = sbr.rel (0) target = $region5
    $region4: #{tpu_custom_call.1} parent=1 // pred_region
      %s16 = sadd.s32 0, 0
      %s18 = ssub.s32 1024, 1024
      %19 = vsyncadd [#allocation3], %s18
      %s20 = smul.addr %s16, 128
      %s21 = scalar_lea.hbm %s0, %s20
      %s22 = sshll.u32 [#allocation2], 4
      %s23 = int_to_ptr.vmem [resolvable:$true] %s22
      %28 = dma.hbm_to_vmem [thread:$0]  %s21, 1024, %s23, [#allocation3], 128, 128, 8
    $region5: #{tpu_custom_call.1} parent=1 // pred_fallthru
      _
    // Predicated region
    $region6: #{tpu_custom_call.1} parent=1 // pred_check
      _
    $region7: #{tpu_custom_call.1} parent=1 // pred_check_branch
      %30 = sbr.rel (0) target = $region9
    $region8: #{tpu_custom_call.1} parent=1 // pred_region
      %s31 = sadd.s32 0, 0
      %s33 = ssub.s32 256, 256
      %34 = vsyncadd [#allocation6], %s33
      %s35 = smul.addr %s31, 128
      %s36 = scalar_lea.hbm %s1, %s35
      %s37 = sshll.u32 [#allocation5], 4
      %s38 = int_to_ptr.vmem [resolvable:$true] %s37
      %43 = dma.hbm_to_vmem [thread:$0]  %s36, 256, %s38, [#allocation6], 128, 128, 8
    $region9: #{tpu_custom_call.1} parent=1 // pred_fallthru
      _
    // Predicated region
    $region10: #{tpu_custom_call.1} parent=1 // pred_check
      _
    $region11: #{tpu_custom_call.1} parent=1 // pred_check_branch
      %45 = sbr.rel (0) target = $region13
    $region12: #{tpu_custom_call.1} parent=1 // pred_region
      %46 = dma.done [#allocation3], 1024
    $region13: #{tpu_custom_call.1} parent=1 // pred_fallthru
      _
    // Predicated region
    $region14: #{tpu_custom_call.1} parent=1 // pred_check
      _
    $region15: #{tpu_custom_call.1} parent=1 // pred_check_branch
      %48 = sbr.rel (0) target = $region17
    $region16: #{tpu_custom_call.1} parent=1 // pred_region
      %49 = dma.done [#allocation6], 256
    $region17: #{tpu_custom_call.1} parent=1 // pred_fallthru
      _
    %s50 = sadd.s32 0, 0
    %s51 = sadd.s32 0, 0
    %p52 = scmp.eq.s32.totalorder 0, 0
    // Predicated region
    $region18: #{tpu_custom_call.1} parent=1 // pred_check
      %p53 = pneg %p52
    $region19: #{tpu_custom_call.1} parent=1 // pred_check_branch
      %55 = sbr.rel (%p53) target = $region21
    $region20: #{tpu_custom_call.1} parent=1 // pred_region
      %56 = vst [vmem:[#allocation7] sm:$0xff] 0.0
      %57 = vst [vmem:[#allocation7 + $0x8] sm:$0xff] 0.0
      %58 = vst [vmem:[#allocation8] sm:$0xff] 0.0
      %59 = vst [vmem:[#allocation8 + $0x8] sm:$0xff] 0.0
      %60 = vst [vmem:[#allocation10] sm:$0xff] 0.0
      %61 = vst [vmem:[#allocation10 + $0x8] sm:$0xff] 0.0
    $region21: #{tpu_custom_call.1} parent=1 // pred_fallthru
      _
    %v62 = vld [vmem:[#allocation2] sm:$0xff]
    %v63 = vld [vmem:[#allocation2 + $0x8] sm:$0xff]
    %v64 = vld [vmem:[#allocation2 + $0x10] sm:$0xff]
    %v65 = vld [vmem:[#allocation2 + $0x18] sm:$0xff]
    %v66 = vld [vmem:[#allocation2 + $0x20] sm:$0xff]
    %v67 = vld [vmem:[#allocation2 + $0x28] sm:$0xff]
    %v68 = vld [vmem:[#allocation2 + $0x30] sm:$0xff]
    %v69 = vld [vmem:[#allocation2 + $0x38] sm:$0xff]
    %v70 = vadd.f32 %v62, %v63
    %v71 = vadd.f32 %v70, %v64
    %v72 = vadd.f32 %v71, %v65
    %v73 = vadd.f32 %v66, %v67
    %v74 = vadd.f32 %v73, %v68
    %v75 = vadd.f32 %v74, %v69
    %v76 = vld [vmem:[#allocation5] sm:$0xff]
    %v77 = vld [vmem:[#allocation5 + $0x8] sm:$0xff]
    %vm78 = vcmp.gt.s32.totalorder %v76, 0
    %vm79 = vcmp.gt.s32.totalorder %v77, 0
    %v80 = vsel %vm78, 1, 0
    %v81 = vsel %vm79, 1, 0
    %v82 = vcvt.s32.f32 %v80
    %v83 = vcvt.s32.f32 %v81
    %v84 = vld [vmem:[#allocation7] sm:$0xff]
    %v85 = vld [vmem:[#allocation7 + $0x8] sm:$0xff]
    %v86 = vmul.f32 %v72, %v82
    %v87 = vmul.f32 %v75, %v83
    %v88 = vadd.f32 %v86, 0.0
    %v89 = vadd.f32 %v87, 0.0
    %v90 = vadd.f32 %v84, %v88
    %v91 = vadd.f32 %v85, %v89
    %92 = vst [vmem:[#allocation7] sm:$0xff] %v90
    %93 = vst [vmem:[#allocation7 + $0x8] sm:$0xff] %v91
    %v94 = vld [vmem:[#allocation8] sm:$0xff]
    %v95 = vld [vmem:[#allocation8 + $0x8] sm:$0xff]
    %v96 = vmul.f32 %v72, %v72
    %v97 = vmul.f32 %v75, %v75
    %v98 = vadd.f32 %v96, 0.0
    %v99 = vadd.f32 %v97, 0.0
    %v100 = vadd.f32 %v94, %v98
    %v101 = vadd.f32 %v95, %v99
    %102 = vst [vmem:[#allocation8] sm:$0xff] %v100
    %103 = vst [vmem:[#allocation8 + $0x8] sm:$0xff] %v101
    %v104 = vld [vmem:[#allocation10] sm:$0xff]
    %v105 = vld [vmem:[#allocation10 + $0x8] sm:$0xff]
    %v106 = vadd.f32 %v82, 0.0
    %v107 = vadd.f32 %v83, 0.0
    %v108 = vadd.f32 %v104, %v106
    %v109 = vadd.f32 %v105, %v107
    %110 = vst [vmem:[#allocation10] sm:$0xff] %v108
    %111 = vst [vmem:[#allocation10 + $0x8] sm:$0xff] %v109
    // Predicated region
    $region22: #{tpu_custom_call.1} parent=1 // pred_check
      _
    $region23: #{tpu_custom_call.1} parent=1 // pred_check_branch
      %113 = sbr.rel (0) target = $region25
    $region24: #{tpu_custom_call.1} parent=1 // pred_region
      %s115 = ssub.s32 256, 256
      %116 = vsyncadd [#allocation4], %s115
      %s117 = sshll.u32 [#allocation7], 4
      %s118 = int_to_ptr.vmem [resolvable:$true] %s117
      %123 = dma.vmem_to_hbm [thread:$0]  %s118, 256, %s2, [#allocation4], 128, 128, 8
    $region25: #{tpu_custom_call.1} parent=1 // pred_fallthru
      _
    // Predicated region
    $region26: #{tpu_custom_call.1} parent=1 // pred_check
      _
    $region27: #{tpu_custom_call.1} parent=1 // pred_check_branch
      %125 = sbr.rel (0) target = $region29
    $region28: #{tpu_custom_call.1} parent=1 // pred_region
      %s127 = ssub.s32 256, 256
      %128 = vsyncadd [#allocation9], %s127
      %s129 = sshll.u32 [#allocation8], 4
      %s130 = int_to_ptr.vmem [resolvable:$true] %s129
      %135 = dma.vmem_to_hbm [thread:$0]  %s130, 256, %s3, [#allocation9], 128, 128, 8
    $region29: #{tpu_custom_call.1} parent=1 // pred_fallthru
      _
    // Predicated region
    $region30: #{tpu_custom_call.1} parent=1 // pred_check
      _
    $region31: #{tpu_custom_call.1} parent=1 // pred_check_branch
      %137 = sbr.rel (0) target = $region33
    $region32: #{tpu_custom_call.1} parent=1 // pred_region
      %s139 = ssub.s32 256, 256
      %140 = vsyncadd [#allocation9], %s139
      %s141 = sshll.u32 [#allocation10], 4
      %s142 = int_to_ptr.vmem [resolvable:$true] %s141
      %147 = dma.vmem_to_hbm [thread:$0]  %s142, 256, %s4, [#allocation9], 128, 128, 8
    $region33: #{tpu_custom_call.1} parent=1 // pred_fallthru
      _
    // Predicated region
    $region34: #{tpu_custom_call.1} parent=1 // pred_check
      _
    $region35: #{tpu_custom_call.1} parent=1 // pred_check_branch
      %149 = sbr.rel (0) target = $region37
    $region36: #{tpu_custom_call.1} parent=1 // pred_region
      %150 = dma.done [#allocation4], 256
    $region37: #{tpu_custom_call.1} parent=1 // pred_fallthru
      _
    // Predicated region
    $region38: #{tpu_custom_call.1} parent=1 // pred_check
      _
    $region39: #{tpu_custom_call.1} parent=1 // pred_check_branch
      %152 = sbr.rel (0) target = $region41
    $region40: #{tpu_custom_call.1} parent=1 // pred_region
      %153 = dma.done [#allocation9], 256
    $region41: #{tpu_custom_call.1} parent=1 // pred_fallthru
      _
    // Predicated region
    $region42: #{tpu_custom_call.1} parent=1 // pred_check
      _
    $region43: #{tpu_custom_call.1} parent=1 // pred_check_branch
      %155 = sbr.rel (0) target = $region45
    $region44: #{tpu_custom_call.1} parent=1 // pred_region
      %156 = dma.done [#allocation9], 256
    $region45: #{tpu_custom_call.1} parent=1 // pred_fallthru
      _
    %157 = vsyncpa [#allocation3], 1
    %158 = vsyncpa [#allocation6], 1
    %159 = vsyncpa [#allocation4], 1
    %160 = vsyncpa [#allocation9], 1

</llo_original>
